<compile_context>
chip_gen: v5e
topology: v5e:2x2
jax: 0.10.0
libtpu: 0.0.40
codegen_flags: <defaults>
</compile_context>

<pallas_src>
import jax
import jax.numpy as jnp
from jax.experimental import pallas as pl
from jax.experimental.pallas import tpu as pltpu


def _make_kernel(apply_relu: bool, m: int):
    """Kernel: o[:, k*M:(k+1)*M] = f(x) for k in 0..2, f = relu∘tanh or tanh.

    Elementwise ops commute with the concat, so f(x) is computed once and the
    dim=1 concat is realized as three static lane-chunk stores into a single
    2-D (N, 3*M) output tile (no concatenate, no XLU, one (8,128) tile at this
    size).
    """
    def kernel(x_ref, o_ref):
        v = jnp.tanh(x_ref[...])
        if apply_relu:
            v = jnp.maximum(v, 0.0)
        for k in range(3):
            o_ref[:, k * m:(k + 1) * m] = v
    return kernel


def cat_tanh_reshape_relu(x):
    N, M = x.shape
    total = N * 3 * M
    assert total % 6 == 0, "cat(x,x,x).view(-1,3,2,1) requires N*M even"
    lead = total // 6
    y4_shape = (lead, 3, 2, 1)

    # The PyTorch branch condition is on a *static* shape -> resolve at trace time.
    apply_relu = (y4_shape != (6, 3, 2, 1))

    itemsize = jnp.dtype(x.dtype).itemsize
    cost = pl.CostEstimate(
        flops=(N * M if apply_relu else 0),          # the relu max ops
        transcendentals=N * M,                       # tanh computed once
        bytes_accessed=4 * N * M * itemsize,         # read x once, write 3x
    )

    # Tiny problem (one tile in, one tile out): no grid, no pipeline —
    # full-array VMEM refs, single pipeline step.
    y_cat = pl.pallas_call(
        _make_kernel(apply_relu, M),
        out_shape=jax.ShapeDtypeStruct((N, 3 * M), x.dtype),
        in_specs=[pl.BlockSpec(memory_space=pltpu.MemorySpace.VMEM)],
        out_specs=pl.BlockSpec(memory_space=pltpu.MemorySpace.VMEM),
        cost_estimate=cost,
    )(x)

    # (N, 3*M) == cat((f(x), f(x), f(x)), dim=1); view(-1, 3, 2, 1) is pure
    # metadata and stays in JAX.
    y = y_cat.reshape(y4_shape)
    # TODO(synk): y.reshape(y.size(0), y.size(2), y.size(3)) is invalid for this
    # element count in PyTorch (would raise RuntimeError); return y as-is.
    return y


def _reference(x):
    """Pure-JAX reference of the same (well-defined prefix of the) forward."""
    y = jnp.tanh(jnp.concatenate([x, x, x], axis=1).reshape(-1, 3, 2, 1))
    if y.shape != (6, 3, 2, 1):
        y = jax.nn.relu(y)
    return y


if __name__ == "__main__":
    key = jax.random.PRNGKey(0)
    x = jax.random.normal(key, (3, 2), dtype=jnp.float32)  # matches torch.randn(3, 2)

    out = cat_tanh_reshape_relu(x)
    out = jax.block_until_ready(out)

    ref = _reference(x)
    assert out.shape == (3, 3, 2, 1), out.shape
    assert jnp.allclose(out, ref, atol=1e-6, rtol=1e-6), "mismatch vs reference"

    print("KERNEL_OK")
</pallas_src>

<mosaic_0001>
module attributes {stable_mosaic.version = 11 : i64} {
  func.func @kernel(%arg0: memref<3x2xf32, #tpu.memory_space<vmem>>, %arg1: memref<3x6xf32, #tpu.memory_space<vmem>>) attributes {dimension_semantics = [], scalar_prefetch = 0 : i64, scratch_operands = 0 : i64, tpu.core_type = #tpu.core_type<tc>} {
    %c0 = arith.constant 0 : index
    %c0_0 = arith.constant 0 : index
    %0 = vector.load %arg0[%c0, %c0_0] : memref<3x2xf32, #tpu.memory_space<vmem>>, vector<3x2xf32>
    %1 = math.tanh %0 : vector<3x2xf32>
    %cst = arith.constant 0.000000e+00 : f32
    %2 = vector.broadcast %cst : f32 to vector<3x2xf32>
    %3 = arith.maximumf %1, %2 : vector<3x2xf32>
    %c0_1 = arith.constant 0 : index
    %c0_2 = arith.constant 0 : index
    %4 = vector.load %arg1[%c0_1, %c0_2] : memref<3x6xf32, #tpu.memory_space<vmem>>, vector<3x2xf32>
    tpu.vector_store %arg1[%c0_1, %c0_2], %3 {strides = array<i32>} : memref<3x6xf32, #tpu.memory_space<vmem>>, vector<3x2xf32>,
    %c0_3 = arith.constant 0 : index
    %c2 = arith.constant 2 : index
    %5 = vector.load %arg1[%c0_3, %c2] : memref<3x6xf32, #tpu.memory_space<vmem>>, vector<3x2xf32>
    tpu.vector_store %arg1[%c0_3, %c2], %3 {strides = array<i32>} : memref<3x6xf32, #tpu.memory_space<vmem>>, vector<3x2xf32>,
    %c0_4 = arith.constant 0 : index
    %c4 = arith.constant 4 : index
    %6 = vector.load %arg1[%c0_4, %c4] : memref<3x6xf32, #tpu.memory_space<vmem>>, vector<3x2xf32>
    tpu.vector_store %arg1[%c0_4, %c4], %3 {strides = array<i32>} : memref<3x6xf32, #tpu.memory_space<vmem>>, vector<3x2xf32>,
    return
  }
}

</mosaic_0001>

<llo_original>
// kernel: tpu_custom_call.1
$region0: #{tpu_custom_call.1}
  #allocation0 [shape = 'u32[]', space=smem, size = 0x4, offset = 0x4, fixed_abs, tag = 'smem constant byte address 0x4 - core index']
  #allocation1 [shape = 'u32[72,128]{1,0:T(1,128)}', space=vmem, size = 0x9000, scoped, tag = 'internal scratch']
  %s0 = inlined_call_operand.vmem [shape: f32[3,2], index: 0, kind: input, shape index: {}]
  %s1 = inlined_call_operand.hbm [shape: f32[3,6], index: 1, kind: output, shape index: {}]
  %s2 = sld [smem:[#allocation0]]
  $region14: #{tpu_custom_call.1} parent=0
    _
  %s4 = ssub.s32 1, %s2
  %s5 = scalar_select 0, %s4, %s2
  $region1: #{tpu_custom_call.1} parent=0
    #allocation2 [shape = 'u8[2048]{0}', space=vmem, size = 0x800, scoped, tag = 'output window, operand 0, single buffered']
    #allocation3 [shape = 's32[1]{0}', space=sflag, size = 0x4, scoped, tag = 'scoped memory for tpu_custom_call.1']
    %6 = vsyncpa [#allocation3], 0
    // Predicated region
    $region2: #{tpu_custom_call.1} parent=1 // pred_check
      _
    $region3: #{tpu_custom_call.1} parent=1 // pred_check_branch
      %8 = sbr.rel (0) target = $region5
    $region4: #{tpu_custom_call.1} parent=1 // pred_region
      _
    $region5: #{tpu_custom_call.1} parent=1 // pred_fallthru
      _
    %v9 = vld [vmem:[%s0] sm:$0x7]
    %v10 = vtanh.pop %v9
    %v11 = vmax.f32 %v10, 0.0
    %vm12 = vcmask 10240
    %13 = vst.msk [vmem:[#allocation2] sm:$0x7] %vm12, %v11
    %15 = vrot.lane.b32.xlu0 %v11, 2
    %v16 = vpop.permute.xlu0 %15
    %vm18 = vcmask 26640
    %19 = vst.msk [vmem:[#allocation2] sm:$0x7] %vm18, %v16
    %20 = vrot.lane.b32.xlu0 %v11, 4
    %v21 = vpop.permute.xlu0 %20
    %vm23 = vcmask 43040
    %24 = vst.msk [vmem:[#allocation2] sm:$0x7] %vm23, %v21
    // Predicated region
    $region6: #{tpu_custom_call.1} parent=1 // pred_check
      _
    $region7: #{tpu_custom_call.1} parent=1 // pred_check_branch
      %26 = sbr.rel (0) target = $region9
    $region8: #{tpu_custom_call.1} parent=1 // pred_region
      %28 = vsyncadd [#allocation3], 0
      %s30 = sshll.u32 [#allocation2], 4
      %s31 = int_to_ptr.vmem [resolvable:$true] %s30
      %s32 = sshll.u32 %s1, 4
      %s33 = int_to_ptr.hbm [resolvable:$true] %s32
      %35 = dma.vmem_to_hbm [thread:$0]  %s31, 64, %s33, [#allocation3]
    $region9: #{tpu_custom_call.1} parent=1 // pred_fallthru
      _
    // Predicated region
    $region10: #{tpu_custom_call.1} parent=1 // pred_check
      _
    $region11: #{tpu_custom_call.1} parent=1 // pred_check_branch
      %37 = sbr.rel (0) target = $region13
    $region12: #{tpu_custom_call.1} parent=1 // pred_region
      %39 = dma.done [#allocation3], 64
    $region13: #{tpu_custom_call.1} parent=1 // pred_fallthru
      _
    %40 = vsyncpa [#allocation3], 1

</llo_original>
